<compile_context>
chip_gen: v6e
topology: v6e:2x2x1
jax: 0.10.0
libtpu: 0.0.40
codegen_flags: <defaults>
</compile_context>

<pallas_src>
import numpy as np
import jax
import jax.numpy as jnp
from jax.experimental import pallas as pl
from jax.experimental.pallas import tpu as pltpu


# ---------------------------------------------------------------------------
# Kernels
# ---------------------------------------------------------------------------

def _qi_kernel_fused(x_ref, w_ref, pcs_ref, re_ref, im_ref):
    """Whole contraction dim resident: single MXU matmul, no accumulator.

    pcs_ref is the packed (3, tn) slab: row 0 = phase, row 1 = cos(phase),
    row 2 = sin(phase).  Rows broadcast over the tm sublanes.
    """
    acc = jnp.dot(x_ref[...], w_ref[...], preferred_element_type=jnp.float32)
    amp = jnp.sin(acc + pcs_ref[0:1, :])
    re_ref[...] = (amp * pcs_ref[1:2, :]).astype(re_ref.dtype)
    im_ref[...] = (amp * pcs_ref[2:3, :]).astype(im_ref.dtype)


def _qi_kernel_acc(x_ref, w_ref, pcs_ref, re_ref, im_ref, acc_ref):
    """K-tiled reduction path (only used for very large input_dim)."""
    k = pl.program_id(2)

    @pl.when(k == 0)
    def _():
        acc_ref[...] = jnp.zeros_like(acc_ref)

    acc_ref[...] += jnp.dot(x_ref[...], w_ref[...],
                            preferred_element_type=jnp.float32)

    # NOTE: outputs are written only on the last k step.  This is correct ONLY
    # because k is the innermost grid axis and the output block index is
    # constant across k (classic accumulator pattern).  Do not reorder the
    # grid without revisiting this.
    @pl.when(k == pl.num_programs(2) - 1)
    def _():
        amp = jnp.sin(acc_ref[...] + pcs_ref[0:1, :])
        re_ref[...] = (amp * pcs_ref[1:2, :]).astype(re_ref.dtype)
        im_ref[...] = (amp * pcs_ref[2:3, :]).astype(im_ref.dtype)


# ---------------------------------------------------------------------------
# Tiling helpers
# ---------------------------------------------------------------------------

def _round_up(v, m):
    return ((v + m - 1) // m) * m


def _pick_tile(padded, align, max_tile):
    """Largest multiple of `align` that divides `padded` and is <= max_tile."""
    best = align
    t = align
    limit = min(padded, max_tile)
    while t <= limit:
        if padded % t == 0:
            best = t
        t += align
    return best


def _shrink_for_steps(padded, tile, align, other_steps, min_steps=4):
    """Shrink `tile` (staying an aligned divisor of `padded`) until the grid
    has at least `min_steps` steps, so both v7x TensorCores get work."""
    while other_steps * (padded // tile) < min_steps and tile > align:
        t = tile - align
        while t >= align and padded % t != 0:
            t -= align
        if t < align:
            break
        tile = t
    return tile


# ---------------------------------------------------------------------------
# Wrapper
# ---------------------------------------------------------------------------

def quantum_inspired_layer(x, weights, phase, *,
                           use_bf16_matmul=False,
                           out_dtype=jnp.float32,
                           tm_max=256, tn_max=512,
                           tk_max=2048, tk_acc_max=1024,
                           vmem_limit_bytes=32 * 1024 * 1024,
                           w_resident_budget_bytes=20 * 1024 * 1024,
                           pack_complex=False):
    """x: (B, in_dim) f32, weights: (in_dim, out_dim) f32, phase: (out_dim,) f32.

    Returns the (re, im) pair of `amplitude * exp(1j*phase)` by default (no
    extra HBM pass).  Pass pack_complex=True to get the complex64 array that
    matches the PyTorch module's return value exactly.

    use_bf16_matmul casts x/W (already scaled by pi) to bf16 before the MXU;
    the absolute error of the sin() argument grows with in_dim, so keep it
    opt-in when tight (~1e-5) accuracy is required.
    """
    B, K = x.shape
    Kw, N = weights.shape
    assert Kw == K and phase.shape == (N,)

    # --- padded problem sizes first, then tiles as aligned divisors ---------
    Bp = _round_up(B, 8)
    Np = _round_up(N, 128)
    # Lane-aligned K for clean x/W blocks; tiny K stays as the full dim.
    Kp = K if K <= 128 else _round_up(K, 128)

    tm = _pick_tile(Bp, 8, tm_max)
    tn = _pick_tile(Np, 128, tn_max)

    in_dt = jnp.bfloat16 if use_bf16_matmul else jnp.float32
    isz = jnp.dtype(in_dt).itemsize
    osz = jnp.dtype(out_dtype).itemsize

    fuse_k = Kp <= tk_max
    tk = Kp if fuse_k else _pick_tile(_round_up(Kp, 128), 128, tk_acc_max)
    if not fuse_k:
        Kp = _round_up(Kp, tk)

    # --- pad (exact: zero rows/cols contribute 0; padded output sliced off) --
    xp = x.astype(in_dt)
    wp = weights.astype(in_dt)
    if (Bp, Kp) != (B, K):
        xp = jnp.pad(xp, ((0, Bp - B), (0, Kp - K)))
    if (Kp, Np) != (K, N):
        wp = jnp.pad(wp, ((0, Kp - K), (0, Np - N)))

    phase_f32 = phase.astype(jnp.float32)
    if Np != N:
        phase_f32 = jnp.pad(phase_f32, (0, Np - N))
    phase2d = phase_f32.reshape(1, Np)
    # One packed (3, Np) slab: [phase; cos(phase); sin(phase)].
    pcs = jnp.concatenate([phase2d, jnp.cos(phase2d), jnp.sin(phase2d)], axis=0)

    out_shape = (jax.ShapeDtypeStruct((Bp, Np), out_dtype),
                 jax.ShapeDtypeStruct((Bp, Np), out_dtype))

    # --- W residency decision (fused path only) ------------------------------
    w_res_bytes = (2 * Kp * Np * isz        # full-N W block (double-buffered)
                   + 2 * tm * Kp * isz      # x row tile
                   + 4 * tm * Np * osz      # two outputs
                   + 2 * 3 * Np * 4)        # phase pack
    w_resident = fuse_k and (w_res_bytes <= w_resident_budget_bytes)

    if fuse_k and w_resident:
        # Give both v7x TensorCores something to chew on when possible.
        tm = _shrink_for_steps(Bp, tm, 8, other_steps=1)
        grid = (Bp // tm,)
        re, im = pl.pallas_call(
            _qi_kernel_fused,
            out_shape=out_shape,
            grid_spec=pltpu.PrefetchScalarGridSpec(
                num_scalar_prefetch=0,
                grid=grid,
                in_specs=[
                    pl.BlockSpec((tm, Kp), lambda i: (i, 0)),     # x row tile
                    pl.BlockSpec((Kp, Np), lambda i: (0, 0)),     # W resident (one DMA)
                    pl.BlockSpec((3, Np), lambda i: (0, 0)),      # phase pack resident
                ],
                out_specs=[
                    pl.BlockSpec((tm, Np), lambda i: (i, 0)),
                    pl.BlockSpec((tm, Np), lambda i: (i, 0)),
                ],
            ),
            compiler_params=pltpu.CompilerParams(
                dimension_semantics=("parallel",),
                vmem_limit_bytes=vmem_limit_bytes),
        )(xp, wp, pcs)
    elif fuse_k:
        # j (N tiles) OUTER, i (B tiles) INNER: the W tile index is constant
        # over the inner axis, so full W is read exactly once; only the small
        # x row tile is re-streamed per j.
        tm = _shrink_for_steps(Bp, tm, 8, other_steps=Np // tn)
        grid = (Np // tn, Bp // tm)
        re, im = pl.pallas_call(
            _qi_kernel_fused,
            out_shape=out_shape,
            grid_spec=pltpu.PrefetchScalarGridSpec(
                num_scalar_prefetch=0,
                grid=grid,
                in_specs=[
                    pl.BlockSpec((tm, Kp), lambda j, i: (i, 0)),
                    pl.BlockSpec((Kp, tn), lambda j, i: (0, j)),
                    pl.BlockSpec((3, tn), lambda j, i: (0, j)),
                ],
                out_specs=[
                    pl.BlockSpec((tm, tn), lambda j, i: (i, j)),
                    pl.BlockSpec((tm, tn), lambda j, i: (i, j)),
                ],
            ),
            compiler_params=pltpu.CompilerParams(
                dimension_semantics=("parallel", "parallel"),
                vmem_limit_bytes=vmem_limit_bytes),
        )(xp, wp, pcs)
    else:
        # Very large K: K-tiled accumulator, k innermost / "arbitrary".
        grid = (Np // tn, Bp // tm, Kp // tk)
        re, im = pl.pallas_call(
            _qi_kernel_acc,
            out_shape=out_shape,
            grid_spec=pltpu.PrefetchScalarGridSpec(
                num_scalar_prefetch=0,
                grid=grid,
                in_specs=[
                    pl.BlockSpec((tm, tk), lambda j, i, k: (i, k)),
                    pl.BlockSpec((tk, tn), lambda j, i, k: (k, j)),
                    pl.BlockSpec((3, tn), lambda j, i, k: (0, j)),
                ],
                out_specs=[
                    pl.BlockSpec((tm, tn), lambda j, i, k: (i, j)),
                    pl.BlockSpec((tm, tn), lambda j, i, k: (i, j)),
                ],
                scratch_shapes=[pltpu.VMEM((tm, tn), jnp.float32)],
            ),
            compiler_params=pltpu.CompilerParams(
                dimension_semantics=("parallel", "parallel", "arbitrary"),
                vmem_limit_bytes=vmem_limit_bytes),
        )(xp, wp, pcs)

    re = re[:B, :N]
    im = im[:B, :N]
    if pack_complex:
        # Extra HBM pass over B*N; only do it when the caller needs complex64.
        return jax.lax.complex(re.astype(jnp.float32), im.astype(jnp.float32))
    return re, im


# ---------------------------------------------------------------------------
# Demo / correctness check
# ---------------------------------------------------------------------------

if __name__ == "__main__":
    HI = jax.lax.Precision.HIGHEST  # full-f32 reference matmul

    # Small shapes implied by the module: batch=8, input_dim=32, output_dim=128
    B, IN_DIM, OUT_DIM = 8, 32, 128
    key = jax.random.PRNGKey(0)
    kx, kw, kp = jax.random.split(key, 3)

    weights = jax.random.normal(kw, (IN_DIM, OUT_DIM), jnp.float32) * np.pi
    phase = jax.random.normal(kp, (OUT_DIM,), jnp.float32) * np.pi
    x = jax.random.normal(kx, (B, IN_DIM), jnp.float32)

    # Default path: (re, im) pair -- no extra complex-pack HBM pass.
    re, im = jax.block_until_ready(quantum_inspired_layer(x, weights, phase))

    amp_ref = jnp.sin(jnp.dot(x, weights, precision=HI) + phase)
    re_ref = amp_ref * jnp.cos(phase)
    im_ref = amp_ref * jnp.sin(phase)
    np.testing.assert_allclose(np.asarray(re), np.asarray(re_ref), rtol=5e-4, atol=5e-4)
    np.testing.assert_allclose(np.asarray(im), np.asarray(im_ref), rtol=5e-4, atol=5e-4)

    # Optional complex64 pack: matches the PyTorch module's return exactly.
    out_c = jax.block_until_ready(
        quantum_inspired_layer(x, weights, phase, pack_complex=True))
    ref_c = jax.lax.complex(re_ref, im_ref)
    assert out_c.shape == (B, OUT_DIM) and out_c.dtype == jnp.complex64
    np.testing.assert_allclose(np.asarray(out_c), np.asarray(ref_c), rtol=5e-4, atol=5e-4)

    # Awkward (non-tile-multiple) shapes: exercises padding + output slicing.
    B2, K2, N2 = 12, 40, 200
    k2x, k2w, k2p = jax.random.split(jax.random.PRNGKey(1), 3)
    w2 = jax.random.normal(k2w, (K2, N2), jnp.float32) * np.pi
    p2 = jax.random.normal(k2p, (N2,), jnp.float32) * np.pi
    x2 = jax.random.normal(k2x, (B2, K2), jnp.float32)
    re2, im2 = jax.block_until_ready(quantum_inspired_layer(x2, w2, p2))
    amp2 = jnp.sin(jnp.dot(x2, w2, precision=HI) + p2)
    np.testing.assert_allclose(np.asarray(re2), np.asarray(amp2 * jnp.cos(p2)),
                               rtol=5e-4, atol=5e-4)
    np.testing.assert_allclose(np.asarray(im2), np.asarray(amp2 * jnp.sin(p2)),
                               rtol=5e-4, atol=5e-4)

    # bf16-operand path (opt-in): loose tolerance -- the sin() argument error
    # grows with in_dim when x/W are rounded to bf16.
    re_b, im_b = jax.block_until_ready(
        quantum_inspired_layer(x, weights, phase, use_bf16_matmul=True))
    np.testing.assert_allclose(np.asarray(re_b), np.asarray(re_ref), atol=0.5)
    np.testing.assert_allclose(np.asarray(im_b), np.asarray(im_ref), atol=0.5)

    print("KERNEL_OK")
</pallas_src>

<mosaic_0001>
module attributes {stable_mosaic.version = 11 : i64} {
  func.func @_qi_kernel_fused(%arg0: i32, %arg1: memref<8x32xf32, #tpu.memory_space<vmem>>, %arg2: memref<32x128xf32, #tpu.memory_space<vmem>>, %arg3: memref<3x128xf32, #tpu.memory_space<vmem>>, %arg4: memref<8x128xf32, #tpu.memory_space<vmem>>, %arg5: memref<8x128xf32, #tpu.memory_space<vmem>>) attributes {dimension_semantics = [#tpu.dimension_semantics<parallel>], iteration_bounds = array<i64: 1>, scalar_prefetch = 0 : i64, scratch_operands = 0 : i64, tpu.core_type = #tpu.core_type<tc>, window_params = [{transform_indices = @transform_0, window_bounds = array<i64: 8, 32>}, {pipeline_mode = #tpu.pipeline_mode<synchronous>, transform_indices = @transform_1, window_bounds = array<i64: 32, 128>}, {pipeline_mode = #tpu.pipeline_mode<synchronous>, transform_indices = @transform_2, window_bounds = array<i64: 3, 128>}, {transform_indices = @transform_3, window_bounds = array<i64: 8, 128>}, {transform_indices = @transform_4, window_bounds = array<i64: 8, 128>}]} {
    %c0 = arith.constant 0 : index
    %c0_0 = arith.constant 0 : index
    %0 = vector.load %arg1[%c0, %c0_0] : memref<8x32xf32, #tpu.memory_space<vmem>>, vector<8x32xf32>
    %c0_1 = arith.constant 0 : index
    %c0_2 = arith.constant 0 : index
    %1 = vector.load %arg2[%c0_1, %c0_2] : memref<32x128xf32, #tpu.memory_space<vmem>>, vector<32x128xf32>
    %cst = arith.constant dense<0.000000e+00> : vector<8x128xf32>
    %2 = tpu.matmul %0, %1, %cst {dimension_numbers = #tpu.dot_dimension_numbers<[1], [0], [0], [1], [0, 0, 1, 1], [], []>} : vector<8x32xf32>, vector<32x128xf32>, vector<8x128xf32> -> vector<8x128xf32>
    %c0_3 = arith.constant 0 : index
    %c0_4 = arith.constant 0 : index
    %3 = vector.load %arg3[%c0_3, %c0_4] : memref<3x128xf32, #tpu.memory_space<vmem>>, vector<1x128xf32>
    %4 = vector.broadcast %3 : vector<1x128xf32> to vector<8x128xf32>
    %5 = arith.addf %2, %4 : vector<8x128xf32>
    %6 = math.sin %5 : vector<8x128xf32>
    %c1 = arith.constant 1 : index
    %c0_5 = arith.constant 0 : index
    %7 = vector.load %arg3[%c1, %c0_5] : memref<3x128xf32, #tpu.memory_space<vmem>>, vector<1x128xf32>
    %8 = vector.broadcast %7 : vector<1x128xf32> to vector<8x128xf32>
    %9 = arith.mulf %6, %8 : vector<8x128xf32>
    %c0_6 = arith.constant 0 : index
    %c0_7 = arith.constant 0 : index
    %10 = vector.load %arg4[%c0_6, %c0_7] : memref<8x128xf32, #tpu.memory_space<vmem>>, vector<8x128xf32>
    tpu.vector_store %arg4[%c0_6, %c0_7], %9 {strides = array<i32>} : memref<8x128xf32, #tpu.memory_space<vmem>>, vector<8x128xf32>,
    %c2 = arith.constant 2 : index
    %c0_8 = arith.constant 0 : index
    %11 = vector.load %arg3[%c2, %c0_8] : memref<3x128xf32, #tpu.memory_space<vmem>>, vector<1x128xf32>
    %12 = vector.broadcast %11 : vector<1x128xf32> to vector<8x128xf32>
    %13 = arith.mulf %6, %12 : vector<8x128xf32>
    %c0_9 = arith.constant 0 : index
    %c0_10 = arith.constant 0 : index
    %14 = vector.load %arg5[%c0_9, %c0_10] : memref<8x128xf32, #tpu.memory_space<vmem>>, vector<8x128xf32>
    tpu.vector_store %arg5[%c0_9, %c0_10], %13 {strides = array<i32>} : memref<8x128xf32, #tpu.memory_space<vmem>>, vector<8x128xf32>,
    return
  }
  func.func @transform_0(%arg0: i32) -> (i32, i32) {
    %c0_i32 = arith.constant 0 : i32
    %c0_i32_0 = arith.constant 0 : i32
    return %arg0, %c0_i32 : i32, i32
  }
  func.func @transform_1(%arg0: i32) -> (i32, i32) {
    %c0_i32 = arith.constant 0 : i32
    %c0_i32_0 = arith.constant 0 : i32
    %c0_i32_1 = arith.constant 0 : i32
    return %c0_i32, %c0_i32_0 : i32, i32
  }
  func.func @transform_2(%arg0: i32) -> (i32, i32) {
    %c0_i32 = arith.constant 0 : i32
    %c0_i32_0 = arith.constant 0 : i32
    %c0_i32_1 = arith.constant 0 : i32
    return %c0_i32, %c0_i32_0 : i32, i32
  }
  func.func @transform_3(%arg0: i32) -> (i32, i32) {
    %c0_i32 = arith.constant 0 : i32
    %c0_i32_0 = arith.constant 0 : i32
    return %arg0, %c0_i32 : i32, i32
  }
  func.func @transform_4(%arg0: i32) -> (i32, i32) {
    %c0_i32 = arith.constant 0 : i32
    %c0_i32_0 = arith.constant 0 : i32
    return %arg0, %c0_i32 : i32, i32
  }
}

</mosaic_0001>

<llo_original>
// kernel: tpu_custom_call.1
$region0: #{tpu_custom_call.1}
  #allocation0 [shape = 'u32[]', space=smem, size = 0x4, offset = 0x4, fixed_abs, tag = 'smem constant byte address 0x4 - core index']
  #allocation1 [shape = 'u32[144,128]{1,0:T(1,128)}', space=vmem, size = 0x12000, scoped, tag = 'internal scratch']
  %s0 = inlined_call_operand.hbm [shape: f32[8,32], index: 0, kind: input, shape index: {}]
  %s1 = inlined_call_operand.hbm [shape: f32[32,128], index: 1, kind: input, shape index: {}]
  %s2 = inlined_call_operand.hbm [shape: f32[3,128], index: 2, kind: input, shape index: {}]
  %s3 = inlined_call_operand.hbm [shape: f32[8,128], index: 3, kind: output, shape index: {0}]
  %s4 = inlined_call_operand.hbm [shape: f32[8,128], index: 4, kind: output, shape index: {1}]
  %5 = xla_tuple %s3, %s4
  %s6 = sld [smem:[#allocation0]]
  $region42: #{tpu_custom_call.1} parent=0
    _
  %s8 = ssub.s32 1, %s6
  %s9 = scalar_select 0, %s8, %s6
  $region1: #{tpu_custom_call.1} parent=0
    #allocation2 [shape = 'u8[4096]{0}', space=vmem, size = 0x1000, scoped, tag = 'input window, operand 0, single buffered']
    #allocation3 [shape = 's32[1]{0}', space=sflag, size = 0x4, scoped, tag = 'scoped memory for tpu_custom_call.1']
    #allocation4 [shape = 's32[1]{0}', space=sflag, size = 0x4, scoped, tag = 'scoped memory for tpu_custom_call.1']
    #allocation5 [shape = 'u8[16384]{0}', space=vmem, size = 0x4000, scoped, tag = 'input window, operand 1, single buffered']
    #allocation6 [shape = 's32[1]{0}', space=sflag, size = 0x4, scoped, tag = 'scoped memory for tpu_custom_call.1']
    #allocation7 [shape = 'u8[2048]{0}', space=vmem, size = 0x800, scoped, tag = 'input window, operand 2, single buffered']
    #allocation8 [shape = 'u8[4096]{0}', space=vmem, size = 0x1000, scoped, tag = 'output window, operand 0, single buffered']
    #allocation9 [shape = 'u8[4096]{0}', space=vmem, size = 0x1000, scoped, tag = 'output window, operand 1, single buffered']
    #allocation10 [shape = 's32[1]{0}', space=sflag, size = 0x4, scoped, tag = 'scoped memory for tpu_custom_call.1']
    %10 = vsyncpa [#allocation3], 0
    %11 = vsyncpa [#allocation6], 0
    %12 = vsyncpa [#allocation4], 0
    %13 = vsyncpa [#allocation10], 0
    // Predicated region
    $region2: #{tpu_custom_call.1} parent=1 // pred_check
      _
    $region3: #{tpu_custom_call.1} parent=1 // pred_check_branch
      %15 = sbr.rel (0) target = $region5
    $region4: #{tpu_custom_call.1} parent=1 // pred_region
      %s17 = ssub.s32 128, 128
      %18 = vsyncadd [#allocation3], %s17
      %s20 = sshll.u32 [#allocation2], 4
      %s21 = int_to_ptr.vmem [resolvable:$true] %s20
      %23 = dma.hbm_to_vmem [thread:$0]  %s0, 128, %s21, [#allocation3]
    $region5: #{tpu_custom_call.1} parent=1 // pred_fallthru
      _
    // Predicated region
    $region6: #{tpu_custom_call.1} parent=1 // pred_check
      _
    $region7: #{tpu_custom_call.1} parent=1 // pred_check_branch
      %25 = sbr.rel (0) target = $region9
    $region8: #{tpu_custom_call.1} parent=1 // pred_region
      %s27 = ssub.s32 512, 512
      %28 = vsyncadd [#allocation6], %s27
      %s29 = sshll.u32 [#allocation5], 4
      %s30 = int_to_ptr.vmem [resolvable:$true] %s29
      %35 = dma.hbm_to_vmem [thread:$0]  %s1, 512, %s30, [#allocation6], 128, 128, 8
    $region9: #{tpu_custom_call.1} parent=1 // pred_fallthru
      _
    // Predicated region
    $region10: #{tpu_custom_call.1} parent=1 // pred_check
      _
    $region11: #{tpu_custom_call.1} parent=1 // pred_check_branch
      %37 = sbr.rel (0) target = $region13
    $region12: #{tpu_custom_call.1} parent=1 // pred_region
      %s39 = ssub.s32 64, 64
      %40 = vsyncadd [#allocation6], %s39
      %s42 = sshll.u32 [#allocation7], 4
      %s43 = int_to_ptr.vmem [resolvable:$true] %s42
      %45 = dma.hbm_to_vmem [thread:$0]  %s2, 64, %s43, [#allocation6]
    $region13: #{tpu_custom_call.1} parent=1 // pred_fallthru
      _
    // Predicated region
    $region14: #{tpu_custom_call.1} parent=1 // pred_check
      _
    $region15: #{tpu_custom_call.1} parent=1 // pred_check_branch
      %47 = sbr.rel (0) target = $region17
    $region16: #{tpu_custom_call.1} parent=1 // pred_region
      %48 = dma.done [#allocation3], 128
    $region17: #{tpu_custom_call.1} parent=1 // pred_fallthru
      _
    // Predicated region
    $region18: #{tpu_custom_call.1} parent=1 // pred_check
      _
    $region19: #{tpu_custom_call.1} parent=1 // pred_check_branch
      %50 = sbr.rel (0) target = $region21
    $region20: #{tpu_custom_call.1} parent=1 // pred_region
      %51 = dma.done [#allocation6], 512
    $region21: #{tpu_custom_call.1} parent=1 // pred_fallthru
      _
    // Predicated region
    $region22: #{tpu_custom_call.1} parent=1 // pred_check
      _
    $region23: #{tpu_custom_call.1} parent=1 // pred_check_branch
      %53 = sbr.rel (0) target = $region25
    $region24: #{tpu_custom_call.1} parent=1 // pred_region
      %54 = dma.done [#allocation6], 64
    $region25: #{tpu_custom_call.1} parent=1 // pred_fallthru
      _
    %v55 = vld [vmem:[#allocation2] sm:$0xff]
    %v56 = vld [vmem:[#allocation5] sm:$0xff]
    %v57 = vld [vmem:[#allocation5 + $0x8] sm:$0xff]
    %v58 = vld [vmem:[#allocation5 + $0x10] sm:$0xff]
    %v59 = vld [vmem:[#allocation5 + $0x18] sm:$0xff]
    %v60 = vld [vmem:[#allocation7] sm:$0x1]
    %v61 = vlaneseq
    %v62 = vshrl.u32 %v61, 7
    %v63 = vsub.s32 0, %v62
    %v64 = vrot.slane %v60, %v63
    %vm65 = vcmask 261120
    %v67 = vsel %vm65, %v55, 0
    %69 = vmatprep.subr.mxu0 0.0
    %70 = vmatpush1.msra.mxu0 0.0
    %71 = vmatprep.subr.mxu0 0.0
    %72 = vmatpush1.msra.mxu0 0.0
    %73 = vmatprep.subr.mxu0 0.0
    %74 = vmatpush1.msra.mxu0 0.0
    %75 = vmatprep.subr.mxu0 0.0
    %76 = vmatpush1.msra.mxu0 0.0
    %77 = vmatprep.subr.mxu0 0.0
    %78 = vmatpush1.msra.mxu0 0.0
    %79 = vmatprep.subr.mxu0 0.0
    %80 = vmatpush1.msra.mxu0 0.0
    %81 = vmatprep.subr.mxu0 0.0
    %82 = vmatpush1.msra.mxu0 0.0
    %83 = vmatprep.subr.mxu0 0.0
    %84 = vmatpush1.msra.mxu0 0.0
    %85 = vmatprep.subr.mxu0 0.0
    %86 = vmatpush1.msra.mxu0 0.0
    %87 = vmatprep.subr.mxu0 0.0
    %88 = vmatpush1.msra.mxu0 0.0
    %89 = vmatprep.subr.mxu0 0.0
    %90 = vmatpush1.msra.mxu0 0.0
    %91 = vmatprep.subr.mxu0 0.0
    %92 = vmatpush1.msra.mxu0 0.0
    %93 = vmatprep.subr.mxu0 0.0
    %94 = vmatpush1.msra.mxu0 %v59
    %95 = vmatprep.subr.mxu0 0.0
    %96 = vmatpush1.msra.mxu0 %v58
    %97 = vmatprep.subr.mxu0 0.0
    %98 = vmatpush1.msra.mxu0 %v57
    %99 = vmatprep.subr.mxu0 0.0
    %100 = vmatpush1.msra.mxu0 %v56
    %101 = vmatprep.subr.mxu0 0.0
    %102 = vmatpush2.msra.mxu0 0.0
    %103 = vmatprep.subr.mxu0 0.0
    %104 = vmatpush2.msra.mxu0 0.0
    %105 = vmatprep.subr.mxu0 0.0
    %106 = vmatpush2.msra.mxu0 0.0
    %107 = vmatprep.subr.mxu0 0.0
    %108 = vmatpush2.msra.mxu0 0.0
    %109 = vmatprep.subr.mxu0 0.0
    %110 = vmatpush2.msra.mxu0 0.0
    %111 = vmatprep.subr.mxu0 0.0
    %112 = vmatpush2.msra.mxu0 0.0
    %113 = vmatprep.subr.mxu0 0.0
    %114 = vmatpush2.msra.mxu0 0.0
    %115 = vmatprep.subr.mxu0 0.0
    %116 = vmatpush2.msra.mxu0 0.0
    %117 = vmatprep.subr.mxu0 0.0
    %118 = vmatpush2.msra.mxu0 0.0
    %119 = vmatprep.subr.mxu0 0.0
    %120 = vmatpush2.msra.mxu0 0.0
    %121 = vmatprep.subr.mxu0 0.0
    %122 = vmatpush2.msra.mxu0 0.0
    %123 = vmatprep.subr.mxu0 0.0
    %124 = vmatpush2.msra.mxu0 0.0
    %125 = vmatprep.subr.mxu0 0.0
    %126 = vmatpush2.msra.mxu0 0.0
    %127 = vmatprep.subr.mxu0 0.0
    %128 = vmatpush2.msra.mxu0 0.0
    %129 = vmatprep.subr.mxu0 0.0
    %130 = vmatpush2.msra.mxu0 0.0
    %131 = vmatprep.subr.mxu0 0.0
    %132 = vmatpush2.msra.mxu0 0.0
    %133 = vmatprep.mubr.f32.mxu0 0.0
    %134 = vmatmul.mubr.f32.gmra.mxu0 %v67
    %v135 = vpop.f32.mrf.mxu0
    %v136 = vadd.f32 %v64, %v135
    %v137 = vpop.f32.mrf.mxu0
    %138 = vdwg.mxu0
    %v139 = vand.u32 2147483647, %v136
    %vm140 = vcmp.le.f32.partialorder %v139, 0.7853982
    %vm141 = vcmp.lt.s32.totalorder %v136, 0
    %v142 = vand.u32 %v136, 2139095040
    %v143 = vshrl.u32 %v142, 23
    %v144 = vsub.s32 %v143, 127
    %v145 = vand.u32 2147483647, %v136
    %v146 = vand.u32 %v145, 8388607
    %v147 = vor.u32 %v146, 8388608
    %v148 = vsub.s32 0, %v147
    %v149 = vadd.s32 %v144, 1
    %vm150 = vcmp.gt.s32.totalorder %v149, 0
    %v151 = vsel %vm150, %v149, 0
    %v152 = vshrl.u32 %v151, 5
    %v153 = vand.u32 %v151, 31
    %v154 = vsub.s32 32, %v153
    %v155 = vshrl.u32 683565275, %v154
    %v156 = vshll.u32 683565275, %v153
    %v157 = vshrl.u32 2475754826, %v154
    %v158 = vor.u32 %v156, %v157
    %v159 = vshll.u32 2475754826, %v153
    %v160 = vshrl.u32 2131351028, %v154
    %v161 = vor.u32 %v159, %v160
    %v162 = vshll.u32 2131351028, %v153
    %v163 = vshrl.u32 2102212464, %v154
    %v164 = vor.u32 %v162, %v163
    %v165 = vshll.u32 2102212464, %v153
    %v166 = vshrl.u32 920167782, %v154
    %v167 = vor.u32 %v165, %v166
    %v168 = vshll.u32 920167782, %v153
    %v169 = vshrl.u32 1326507024, %v154
    %v170 = vor.u32 %v168, %v169
    %vm171 = vcmp.lt.s32.totalorder %v152, 1
    %vm172 = vcmp.lt.s32.totalorder %v152, 2
    %vm173 = vcmp.lt.s32.totalorder %v152, 3
    %vm174 = vcmp.lt.s32.totalorder %v152, 4
    %v175 = vsel %vm171, %v155, %v158
    %v176 = vsel %vm174, %v164, 2102212464
    %v177 = vsel %vm173, %v161, %v176
    %v178 = vsel %vm172, %v175, %v177
    %v179 = vsel %vm171, %v158, %v161
    %v180 = vsel %vm174, %v167, 920167782
    %v181 = vsel %vm173, %v164, %v180
    %v182 = vsel %vm172, %v179, %v181
    %v183 = vsel %vm171, %v161, %v164
    %v184 = vsel %vm174, %v170, 1326507024
    %v185 = vsel %vm173, %v167, %v184
    %v186 = vsel %vm172, %v183, %v185
    %v187 = vshll.u32 %v147, 8
    %v188 = vmul.u32.u64.compose %v187, %v186
    %v189 = vextract.low.u32 %v188
    %v190 = vextract.high.u32 %v188
    %v191 = vmul.u32.u64.compose %v187, %v182
    %v192 = vextract.low.u32 %v191
    %v193 = vextract.high.u32 %v191
    %v194 = vmul.u32 %v187, %v178
    %v195 = vadd.s32 %v190, %v192
    %vm196 = vc.u32 %v190, %v192
    %v197 = vadd.s32 %v193, 1
    %v198 = vsel %vm196, %v197, %v193
    %v199 = vadd.s32 %v194, %v198
    %v200 = vadd.s32 %v199, 536870912
    %v201 = vshrl.u32 %v200, 30
    %v202 = vshll.u32 %v201, 30
    %v203 = vsub.s32 %v199, %v202
    %vm204 = vcmp.lt.s32.totalorder %v203, 0
    %v205 = vsub.s32 0, %v203
    %v206 = vsel %vm204, %v205, %v203
    %v207 = vclz %v206
    %v208 = vsub.s32 %v207, 2
    %vm209 = vcmp.gt.s32.totalorder 0, %v208
    %v210 = vsel %vm209, 0, %v208
    %v211 = vsub.s32 32, %v210
    %v212 = vshll.u32 %v203, %v210
    %v213 = vshrl.u32 %v195, %v211
    %v214 = vor.u32 %v212, %v213
    %v215 = vsub.s32 4294967266, %v210
    %v216 = vadd.s32 %v215, 127
    %v217 = vshll.u32 %v216, 23
    %v218 = vor.u32 4788187, %v217
    %v219 = vand.u32 2147483647, %v218
    %v221 = vcvt.s32.f32 %v214
    %v222 = vmul.f32 %v221, %v219
    %v223 = vxor.u32 %v222, 2147483648
    %v224 = vsel %vm141, %v223, %v222
    %v225 = vsub.s32 4, %v201
    %v226 = vsel %vm141, %v225, %v201
    %v227 = vsel %vm140, %v136, %v224
    %v228 = vsel %vm140, 0, %v226
    %v229 = vcosq.f32.pop %v227
    %v230 = vsinq.f32.pop %v227
    %vm231 = vweird.f32 %v136
    %v232 = vadd.s32 %v228, 3
    %v233 = vand.u32 %v232, 3
    %vm234 = vcmp.lt.s32.totalorder %v233, 2
    %vm235 = vcmp.eq.s32.totalorder %v233, 0
    %v236 = vxor.u32 %v230, 2147483648
    %v237 = vsel %vm235, %v229, %v236
    %vm238 = vcmp.eq.s32.totalorder %v233, 2
    %v239 = vxor.u32 %v229, 2147483648
    %v240 = vsel %vm238, %v239, %v230
    %v241 = vsel %vm234, %v237, %v240
    %v242 = vsel %vm231, nan, %v241
    %v243 = vld [vmem:[#allocation7 + $0x1] sm:$0x1]
    %v244 = vlaneseq
    %v245 = vshrl.u32 %v244, 7
    %v246 = vsub.s32 0, %v245
    %v247 = vrot.slane %v243, %v246
    %v248 = vmul.f32 %v242, %v247
    %249 = vst [vmem:[#allocation8] sm:$0xff] %v248
    %v250 = vld [vmem:[#allocation7 + $0x2] sm:$0x1]
    %v251 = vlaneseq
    %v252 = vshrl.u32 %v251, 7
    %v253 = vsub.s32 0, %v252
    %v254 = vrot.slane %v250, %v253
    %v255 = vmul.f32 %v242, %v254
    %256 = vst [vmem:[#allocation9] sm:$0xff] %v255
    // Predicated region
    $region26: #{tpu_custom_call.1} parent=1 // pred_check
      _
    $region27: #{tpu_custom_call.1} parent=1 // pred_check_branch
      %258 = sbr.rel (0) target = $region29
    $region28: #{tpu_custom_call.1} parent=1 // pred_region
      %s260 = ssub.s32 128, 128
      %261 = vsyncadd [#allocation4], %s260
      %s263 = sshll.u32 [#allocation8], 4
      %s264 = int_to_ptr.vmem [resolvable:$true] %s263
      %266 = dma.vmem_to_hbm [thread:$0]  %s264, 128, %s3, [#allocation4]
    $region29: #{tpu_custom_call.1} parent=1 // pred_fallthru
      _
    // Predicated region
    $region30: #{tpu_custom_call.1} parent=1 // pred_check
      _
    $region31: #{tpu_custom_call.1} parent=1 // pred_check_branch
      %268 = sbr.rel (0) target = $region33
    $region32: #{tpu_custom_call.1} parent=1 // pred_region
      %s270 = ssub.s32 128, 128
      %271 = vsyncadd [#allocation10], %s270
      %s273 = sshll.u32 [#allocation9], 4
      %s274 = int_to_ptr.vmem [resolvable:$true] %s273
      %276 = dma.vmem_to_hbm [thread:$0]  %s274, 128, %s4, [#allocation10]
    $region33: #{tpu_custom_call.1} parent=1 // pred_fallthru
      _
    // Predicated region
    $region34: #{tpu_custom_call.1} parent=1 // pred_check
      _
    $region35: #{tpu_custom_call.1} parent=1 // pred_check_branch
      %278 = sbr.rel (0) target = $region37
    $region36: #{tpu_custom_call.1} parent=1 // pred_region
      %279 = dma.done [#allocation4], 128
    $region37: #{tpu_custom_call.1} parent=1 // pred_fallthru
      _
    // Predicated region
    $region38: #{tpu_custom_call.1} parent=1 // pred_check
      _
    $region39: #{tpu_custom_call.1} parent=1 // pred_check_branch
      %281 = sbr.rel (0) target = $region41
    $region40: #{tpu_custom_call.1} parent=1 // pred_region
      %282 = dma.done [#allocation10], 128
    $region41: #{tpu_custom_call.1} parent=1 // pred_fallthru
      _
    %283 = vsyncpa [#allocation3], 1
    %284 = vsyncpa [#allocation6], 1
    %285 = vsyncpa [#allocation4], 1
    %286 = vsyncpa [#allocation10], 1

</llo_original>
